<compile_context>
chip_gen: v7x
topology: tpu7x:2x2x1
jax: 0.10.0
libtpu: 0.0.40
codegen_flags: <defaults>
</compile_context>

<pallas_src>
import math
import functools

import jax
import jax.numpy as jnp
from jax.experimental import pallas as pl
from jax.experimental.pallas import tpu as pltpu


_INV_SQRT2 = float(1.0 / math.sqrt(2.0))


def _gelu_exact(h):
    # Exact erf-based GELU in f32 (matches nn.GELU(approximate='none')).
    return 0.5 * h * (1.0 + jax.lax.erf(h * jnp.float32(_INV_SQRT2)))


def _ffn_resident_kernel(x_ref, w1_ref, b1_ref, w2_ref, b2_ref, o_ref):
    """Whole-H fused FFN for one (TM, E) token tile; weights stay VMEM-resident."""
    x = x_ref[...].astype(jnp.bfloat16)                        # MXU fast path
    h = jnp.dot(x, w1_ref[...], preferred_element_type=jnp.float32) + b1_ref[...]
    h = _gelu_exact(h)
    out = jnp.dot(h.astype(jnp.bfloat16), w2_ref[...],
                  preferred_element_type=jnp.float32) + b2_ref[...]
    o_ref[...] = out.astype(o_ref.dtype)


def _ffn_htiled_kernel(x_ref, w1_ref, b1_ref, w2_ref, b2_ref, o_ref, acc_ref):
    """Fallback for huge hidden dims: one (TM, TH) step; accumulates fc2 over H."""
    h_step = pl.program_id(1)

    @pl.when(h_step == 0)
    def _init():
        acc_ref[...] = jnp.zeros_like(acc_ref)

    x = x_ref[...].astype(jnp.bfloat16)
    h = jnp.dot(x, w1_ref[...], preferred_element_type=jnp.float32) + b1_ref[...]
    h = _gelu_exact(h)
    acc_ref[...] += jnp.dot(h.astype(jnp.bfloat16), w2_ref[...],
                            preferred_element_type=jnp.float32)

    @pl.when(h_step == pl.num_programs(1) - 1)
    def _finalize():
        o_ref[...] = (acc_ref[...] + b2_ref[...]).astype(o_ref.dtype)


def _round_up(x, m):
    return -(-x // m) * m


def _vmem_limit_bytes():
    """Per-generation VMEM budget: ~3/4 of physical (48 MiB v7x, 96 MiB v5e/v6e)."""
    try:
        phys = int(pltpu.get_tpu_info().vmem_capacity_bytes)
    except Exception:
        phys = 0
    if phys <= 0:
        phys = 64 * 1024 * 1024            # conservative: v7x has the smallest VMEM
    return phys * 3 // 4


def _pick_tm(M, tm):
    """Token tile: big (multiple of 256) but keep >= 2 tiles for v7x's dual TCs."""
    if M <= 256:
        return M
    if M <= tm:
        return min(_round_up(pl.cdiv(M, 2), 256), tm)
    return tm


def prepare_params(w1, b1, w2, b2):
    """One-time weight prep (outside the hot path): bf16 cast + zero padding.

    H is padded to a multiple of 512 and E to a multiple of 128.  Padding is
    exact: zero W1 cols + zero b1 -> GELU(0)=0 -> zero fc2 contribution; zero
    W2 cols + zero b2 -> zero padded output columns (sliced off by the wrapper).
    Weights are (in_features, out_features), i.e. transposed nn.Linear layout.
    """
    E, H = w1.shape
    assert w2.shape == (H, E) and b1.shape == (H,) and b2.shape == (E,)
    Ep, Hp = _round_up(E, 128), _round_up(H, 512)
    w1p = jnp.pad(w1, ((0, Ep - E), (0, Hp - H))).astype(jnp.bfloat16)
    w2p = jnp.pad(w2, ((0, Hp - H), (0, Ep - E))).astype(jnp.bfloat16)
    b1p = jnp.pad(b1, ((0, Hp - H),)).reshape(1, Hp).astype(jnp.float32)
    b2p = jnp.pad(b2, ((0, Ep - E),)).reshape(1, Ep).astype(jnp.float32)
    return w1p, b1p, w2p, b2p


@functools.partial(jax.jit, static_argnames=("tm", "th"))
def feed_forward(x, w1, b1, w2, b2, *, tm=512, th=512):
    """x: (B, S, E).  w1/b1/w2/b2: padded bf16/f32 params from prepare_params()."""
    B, S, E = x.shape
    Ep, Hp = w1.shape
    assert w2.shape == (Hp, Ep) and b1.shape == (1, Hp) and b2.shape == (1, Ep)
    assert Ep % 128 == 0 and Hp % 128 == 0 and Ep >= E
    M = B * S
    out_dtype = x.dtype
    itemsize = jnp.dtype(out_dtype).itemsize

    x2d = x.reshape(M, E)
    if Ep != E:
        # Rare path: model dim not a multiple of 128; pad so stores stay lane-dense.
        x2d = jnp.pad(x2d, ((0, 0), (0, Ep - E)))

    TM = _pick_tm(M, tm)
    num_m = pl.cdiv(M, TM)
    vmem_limit = _vmem_limit_bytes()

    # Weight residency test: double-buffered bf16 weights + per-tile working set
    # (x/out tiles double-buffered, f32 + bf16 GELU intermediate staged in VMEM).
    weight_vmem = 2 * 2 * (w1.size + w2.size) + 2 * 4 * (b1.size + b2.size)
    act_vmem = TM * (2 * Ep * itemsize        # x tile (double-buffered)
                     + 2 * Ep * itemsize      # out tile (double-buffered)
                     + Ep * 4                 # f32 fc2 result before the cast
                     + Hp * (4 + 2))          # f32 GELU intermediate + bf16 copy
    resident = weight_vmem + act_vmem <= (vmem_limit * 85) // 100

    if resident:
        grid = (num_m,)
        in_specs = [
            pl.BlockSpec((TM, Ep), lambda i: (i, 0)),      # x tile (streamed over M)
            pl.BlockSpec((Ep, Hp), lambda i: (0, 0)),      # W1: VMEM-resident
            pl.BlockSpec((1, Hp),  lambda i: (0, 0)),      # b1: VMEM-resident
            pl.BlockSpec((Hp, Ep), lambda i: (0, 0)),      # W2: VMEM-resident
            pl.BlockSpec((1, Ep),  lambda i: (0, 0)),      # b2: VMEM-resident
        ]
        out_specs = pl.BlockSpec((TM, Ep), lambda i: (i, 0))
        scratch_shapes = []
        kernel = _ffn_resident_kernel
        dim_sem = ("parallel",)
        weight_stream_bytes = 2 * (w1.size + w2.size)             # fetched once
    else:
        TH = min(th, Hp)
        while Hp % TH:
            TH -= 128
        grid = (num_m, Hp // TH)
        in_specs = [
            pl.BlockSpec((TM, Ep), lambda i, h: (i, 0)),   # x tile (resident over H)
            pl.BlockSpec((Ep, TH), lambda i, h: (0, h)),   # W1 column panel
            pl.BlockSpec((1, TH),  lambda i, h: (0, h)),   # b1 chunk
            pl.BlockSpec((TH, Ep), lambda i, h: (h, 0)),   # W2 row panel
            pl.BlockSpec((1, Ep),  lambda i, h: (0, 0)),   # b2
        ]
        out_specs = pl.BlockSpec((TM, Ep), lambda i, h: (i, 0))
        scratch_shapes = [pltpu.VMEM((TM, Ep), jnp.float32)]
        kernel = _ffn_htiled_kernel
        dim_sem = ("parallel", "arbitrary")
        weight_stream_bytes = num_m * 2 * (w1.size + w2.size)     # re-streamed per M tile

    flops = 2 * M * Ep * Hp * 2                                   # two matmuls
    bytes_accessed = (x2d.size * jnp.dtype(x2d.dtype).itemsize
                      + weight_stream_bytes
                      + 4 * (b1.size + b2.size)
                      + M * Ep * itemsize)
    cost = pl.CostEstimate(flops=flops, transcendentals=M * Hp,
                           bytes_accessed=bytes_accessed)

    out2d = pl.pallas_call(
        kernel,
        out_shape=jax.ShapeDtypeStruct((M, Ep), out_dtype),
        grid_spec=pltpu.PrefetchScalarGridSpec(
            num_scalar_prefetch=0,
            grid=grid,
            in_specs=in_specs,
            out_specs=out_specs,
            scratch_shapes=scratch_shapes,
        ),
        compiler_params=pltpu.CompilerParams(
            dimension_semantics=dim_sem,
            vmem_limit_bytes=vmem_limit,
        ),
        cost_estimate=cost,
    )(x2d, w1, b1, w2, b2)

    if Ep != E:
        out2d = out2d[:, :E]
    return out2d.reshape(B, S, E)


def init_params(key, embed_dim, forward_expansion=1):
    """Deterministic init mimicking nn.Linear's U(-1/sqrt(fan_in), 1/sqrt(fan_in))."""
    hidden = embed_dim * forward_expansion
    k1, k2, k3, k4 = jax.random.split(key, 4)
    bound1 = 1.0 / math.sqrt(embed_dim)
    bound2 = 1.0 / math.sqrt(hidden)
    w1 = jax.random.uniform(k1, (embed_dim, hidden), jnp.float32, -bound1, bound1)
    b1 = jax.random.uniform(k2, (hidden,), jnp.float32, -bound1, bound1)
    w2 = jax.random.uniform(k3, (hidden, embed_dim), jnp.float32, -bound2, bound2)
    b2 = jax.random.uniform(k4, (embed_dim,), jnp.float32, -bound2, bound2)
    return w1, b1, w2, b2


if __name__ == "__main__":
    # Small but lane-dense demo shapes (E multiple of 256 keeps MXU passes full
    # and the output stores unmasked).  Real ViT dims: E=512/768, expansion 4.
    batch, seq, embed = 2, 8, 256
    forward_expansion = 2

    key = jax.random.PRNGKey(0)
    kx, kp = jax.random.split(key)
    x = jax.random.normal(kx, (batch, seq, embed), jnp.float32)
    w1, b1, w2, b2 = init_params(kp, embed, forward_expansion)

    # One-time weight prep (bf16 cast + padding) kept OUT of the hot path.
    params = prepare_params(w1, b1, w2, b2)
    params = jax.block_until_ready(params)

    out = feed_forward(x, *params)
    out = jax.block_until_ready(out)

    # Reference in plain JAX f32 (same math as the PyTorch module in eval mode).
    # Tolerance loosened because the kernel feeds bf16 inputs to the MXU
    # (f32 accumulation), per the performance guidance.
    h_ref = jax.nn.gelu(x @ w1 + b1, approximate=False)
    ref = h_ref @ w2 + b2
    assert out.shape == (batch, seq, embed)
    err = float(jnp.max(jnp.abs(out - ref)))
    assert jnp.allclose(out, ref, atol=3e-2, rtol=3e-2), f"max abs err = {err}"

    print("KERNEL_OK")
</pallas_src>

<mosaic_0001>
module attributes {stable_mosaic.version = 11 : i64} {
  func.func @_ffn_resident_kernel(%arg0: i32, %arg1: memref<16x256xf32, #tpu.memory_space<vmem>>, %arg2: memref<256x512xbf16, #tpu.memory_space<vmem>>, %arg3: memref<1x512xf32, #tpu.memory_space<vmem>>, %arg4: memref<512x256xbf16, #tpu.memory_space<vmem>>, %arg5: memref<1x256xf32, #tpu.memory_space<vmem>>, %arg6: memref<16x256xf32, #tpu.memory_space<vmem>>) attributes {dimension_semantics = [#tpu.dimension_semantics<parallel>], iteration_bounds = array<i64: 1>, scalar_prefetch = 0 : i64, scratch_operands = 0 : i64, tpu.core_type = #tpu.core_type<tc>, window_params = [{transform_indices = @transform_0, window_bounds = array<i64: 16, 256>}, {pipeline_mode = #tpu.pipeline_mode<synchronous>, transform_indices = @transform_1, window_bounds = array<i64: 256, 512>}, {pipeline_mode = #tpu.pipeline_mode<synchronous>, transform_indices = @transform_2, window_bounds = array<i64: 1, 512>}, {pipeline_mode = #tpu.pipeline_mode<synchronous>, transform_indices = @transform_3, window_bounds = array<i64: 512, 256>}, {pipeline_mode = #tpu.pipeline_mode<synchronous>, transform_indices = @transform_4, window_bounds = array<i64: 1, 256>}, {transform_indices = @transform_5, window_bounds = array<i64: 16, 256>}]} {
    %c0 = arith.constant 0 : index
    %c0_0 = arith.constant 0 : index
    %0 = vector.load %arg1[%c0, %c0_0] : memref<16x256xf32, #tpu.memory_space<vmem>>, vector<16x256xf32>
    %1 = arith.truncf %0 : vector<16x256xf32> to vector<16x256xbf16>
    %c0_1 = arith.constant 0 : index
    %c0_2 = arith.constant 0 : index
    %2 = vector.load %arg2[%c0_1, %c0_2] : memref<256x512xbf16, #tpu.memory_space<vmem>>, vector<256x512xbf16>
    %cst = arith.constant dense<0.000000e+00> : vector<16x512xf32>
    %3 = tpu.matmul %1, %2, %cst {dimension_numbers = #tpu.dot_dimension_numbers<[1], [0], [0], [1], [0, 0, 1, 1], [], []>} : vector<16x256xbf16>, vector<256x512xbf16>, vector<16x512xf32> -> vector<16x512xf32>
    %c0_3 = arith.constant 0 : index
    %c0_4 = arith.constant 0 : index
    %4 = vector.load %arg3[%c0_3, %c0_4] : memref<1x512xf32, #tpu.memory_space<vmem>>, vector<1x512xf32>
    %5 = vector.broadcast %4 : vector<1x512xf32> to vector<16x512xf32>
    %6 = arith.addf %3, %5 : vector<16x512xf32>
    %cst_5 = arith.constant 5.000000e-01 : f32
    %7 = vector.broadcast %cst_5 : f32 to vector<16x512xf32>
    %8 = arith.mulf %7, %6 : vector<16x512xf32>
    %cst_6 = arith.constant 0.707106769 : f32
    %9 = vector.broadcast %cst_6 : f32 to vector<16x512xf32>
    %10 = arith.mulf %6, %9 : vector<16x512xf32>
    %11 = math.erf %10 : vector<16x512xf32>
    %cst_7 = arith.constant 1.000000e+00 : f32
    %12 = vector.broadcast %cst_7 : f32 to vector<16x512xf32>
    %13 = arith.addf %12, %11 : vector<16x512xf32>
    %14 = arith.mulf %8, %13 : vector<16x512xf32>
    %15 = arith.truncf %14 : vector<16x512xf32> to vector<16x512xbf16>
    %c0_8 = arith.constant 0 : index
    %c0_9 = arith.constant 0 : index
    %16 = vector.load %arg4[%c0_8, %c0_9] : memref<512x256xbf16, #tpu.memory_space<vmem>>, vector<512x256xbf16>
    %cst_10 = arith.constant dense<0.000000e+00> : vector<16x256xf32>
    %17 = tpu.matmul %15, %16, %cst_10 {dimension_numbers = #tpu.dot_dimension_numbers<[1], [0], [0], [1], [0, 0, 1, 1], [], []>} : vector<16x512xbf16>, vector<512x256xbf16>, vector<16x256xf32> -> vector<16x256xf32>
    %c0_11 = arith.constant 0 : index
    %c0_12 = arith.constant 0 : index
    %18 = vector.load %arg5[%c0_11, %c0_12] : memref<1x256xf32, #tpu.memory_space<vmem>>, vector<1x256xf32>
    %19 = vector.broadcast %18 : vector<1x256xf32> to vector<16x256xf32>
    %20 = arith.addf %17, %19 : vector<16x256xf32>
    %c0_13 = arith.constant 0 : index
    %c0_14 = arith.constant 0 : index
    %21 = vector.load %arg6[%c0_13, %c0_14] : memref<16x256xf32, #tpu.memory_space<vmem>>, vector<16x256xf32>
    tpu.vector_store %arg6[%c0_13, %c0_14], %20 {strides = array<i32>} : memref<16x256xf32, #tpu.memory_space<vmem>>, vector<16x256xf32>,
    return
  }
  func.func @transform_0(%arg0: i32) -> (i32, i32) {
    %c0_i32 = arith.constant 0 : i32
    %c0_i32_0 = arith.constant 0 : i32
    return %arg0, %c0_i32 : i32, i32
  }
  func.func @transform_1(%arg0: i32) -> (i32, i32) {
    %c0_i32 = arith.constant 0 : i32
    %c0_i32_0 = arith.constant 0 : i32
    %c0_i32_1 = arith.constant 0 : i32
    return %c0_i32, %c0_i32_0 : i32, i32
  }
  func.func @transform_2(%arg0: i32) -> (i32, i32) {
    %c0_i32 = arith.constant 0 : i32
    %c0_i32_0 = arith.constant 0 : i32
    %c0_i32_1 = arith.constant 0 : i32
    return %c0_i32, %c0_i32_0 : i32, i32
  }
  func.func @transform_3(%arg0: i32) -> (i32, i32) {
    %c0_i32 = arith.constant 0 : i32
    %c0_i32_0 = arith.constant 0 : i32
    %c0_i32_1 = arith.constant 0 : i32
    return %c0_i32, %c0_i32_0 : i32, i32
  }
  func.func @transform_4(%arg0: i32) -> (i32, i32) {
    %c0_i32 = arith.constant 0 : i32
    %c0_i32_0 = arith.constant 0 : i32
    %c0_i32_1 = arith.constant 0 : i32
    return %c0_i32, %c0_i32_0 : i32, i32
  }
  func.func @transform_5(%arg0: i32) -> (i32, i32) {
    %c0_i32 = arith.constant 0 : i32
    %c0_i32_0 = arith.constant 0 : i32
    return %arg0, %c0_i32 : i32, i32
  }
}

</mosaic_0001>

<llo_original>
// kernel: feed_forward.1
$region0: #{feed_forward.1}
  #allocation0 [shape = 'u32[]', space=smem, size = 0x4, offset = 0x4, fixed_abs, tag = 'smem constant byte address 0x4 - core index']
  #allocation1 [shape = 'u32[144,128]{1,0:T(1,128)}', space=vmem, size = 0x12000, scoped, tag = 'internal scratch']
  %s0 = inlined_call_operand.hbm [shape: f32[16,256], index: 0, kind: input, shape index: {}]
  %s1 = inlined_call_operand.hbm [shape: bf16[256,512], index: 1, kind: input, shape index: {}]
  %s2 = inlined_call_operand.vmem [shape: f32[1,512], index: 2, kind: input, shape index: {}]
  %s3 = inlined_call_operand.hbm [shape: bf16[512,256], index: 3, kind: input, shape index: {}]
  %s4 = inlined_call_operand.vmem [shape: f32[1,256], index: 4, kind: input, shape index: {}]
  %s5 = inlined_call_operand.hbm [shape: f32[16,256], index: 5, kind: output, shape index: {}]
  %s6 = sld [smem:[#allocation0]]
  $region42: #{feed_forward.1} parent=0
    _
  %s8 = ssub.s32 1, %s6
  %s9 = scalar_select 0, %s8, %s6
  $region1: #{feed_forward.1} parent=0
    #allocation2 [shape = 'u8[16384]{0}', space=vmem, size = 0x4000, scoped, tag = 'input window, operand 0, single buffered']
    #allocation3 [shape = 's32[1]{0}', space=sflag, size = 0x4, scoped, tag = 'scoped memory for feed_forward.1']
    #allocation4 [shape = 's32[1]{0}', space=sflag, size = 0x4, scoped, tag = 'scoped memory for feed_forward.1']
    #allocation5 [shape = 'u8[262144]{0}', space=vmem, size = 0x40000, scoped, tag = 'input window, operand 1, single buffered']
    #allocation6 [shape = 's32[1]{0}', space=sflag, size = 0x4, scoped, tag = 'scoped memory for feed_forward.1']
    #allocation7 [shape = 'u8[262144]{0}', space=vmem, size = 0x40000, scoped, tag = 'input window, operand 3, single buffered']
    #allocation8 [shape = 'u8[16384]{0}', space=vmem, size = 0x4000, scoped, tag = 'output window, operand 0, single buffered']
    %10 = vsyncpa [#allocation3], 0
    %11 = vsyncpa [#allocation6], 0
    %12 = vsyncpa [#allocation4], 0
    // Predicated region
    $region2: #{feed_forward.1} parent=1 // pred_check
      _
    $region3: #{feed_forward.1} parent=1 // pred_check_branch
      %14 = sbr.rel (0) target = $region5
    $region4: #{feed_forward.1} parent=1 // pred_region
      %s16 = ssub.s32 512, 512
      %17 = vsyncadd [#allocation3], %s16
      %s18 = sshll.u32 [#allocation2], 4
      %s19 = int_to_ptr.vmem [resolvable:$true] %s18
      %24 = dma.hbm_to_vmem [thread:$0]  %s0, 512, %s19, [#allocation3], 256, 256, 16
    $region5: #{feed_forward.1} parent=1 // pred_fallthru
      _
    // Predicated region
    $region6: #{feed_forward.1} parent=1 // pred_check
      _
    $region7: #{feed_forward.1} parent=1 // pred_check_branch
      %26 = sbr.rel (0) target = $region9
    $region8: #{feed_forward.1} parent=1 // pred_region
      %s28 = ssub.s32 8192, 8192
      %29 = vsyncadd [#allocation6], %s28
      %s30 = sshll.u32 [#allocation5], 4
      %s31 = int_to_ptr.vmem [resolvable:$true] %s30
      %36 = dma.hbm_to_vmem [thread:$0]  %s1, 8192, %s31, [#allocation6], 256, 256, 16
    $region9: #{feed_forward.1} parent=1 // pred_fallthru
      _
    // Predicated region
    $region10: #{feed_forward.1} parent=1 // pred_check
      _
    $region11: #{feed_forward.1} parent=1 // pred_check_branch
      %38 = sbr.rel (0) target = $region13
    $region12: #{feed_forward.1} parent=1 // pred_region
      _
    $region13: #{feed_forward.1} parent=1 // pred_fallthru
      _
    // Predicated region
    $region14: #{feed_forward.1} parent=1 // pred_check
      _
    $region15: #{feed_forward.1} parent=1 // pred_check_branch
      %40 = sbr.rel (0) target = $region17
    $region16: #{feed_forward.1} parent=1 // pred_region
      %s42 = ssub.s32 8192, 8192
      %43 = vsyncadd [#allocation6], %s42
      %s44 = sshll.u32 [#allocation7], 4
      %s45 = int_to_ptr.vmem [resolvable:$true] %s44
      %50 = dma.hbm_to_vmem [thread:$0]  %s3, 8192, %s45, [#allocation6], 128, 128, 8
    $region17: #{feed_forward.1} parent=1 // pred_fallthru
      _
    // Predicated region
    $region18: #{feed_forward.1} parent=1 // pred_check
      _
    $region19: #{feed_forward.1} parent=1 // pred_check_branch
      %52 = sbr.rel (0) target = $region21
    $region20: #{feed_forward.1} parent=1 // pred_region
      _
    $region21: #{feed_forward.1} parent=1 // pred_fallthru
      _
    // Predicated region
    $region22: #{feed_forward.1} parent=1 // pred_check
      _
    $region23: #{feed_forward.1} parent=1 // pred_check_branch
      %54 = sbr.rel (0) target = $region25
    $region24: #{feed_forward.1} parent=1 // pred_region
      %55 = dma.done [#allocation3], 512
    $region25: #{feed_forward.1} parent=1 // pred_fallthru
      _
    // Predicated region
    $region26: #{feed_forward.1} parent=1 // pred_check
      _
    $region27: #{feed_forward.1} parent=1 // pred_check_branch
      %57 = sbr.rel (0) target = $region29
    $region28: #{feed_forward.1} parent=1 // pred_region
      %58 = dma.done [#allocation6], 8192
    $region29: #{feed_forward.1} parent=1 // pred_fallthru
      _
    // Predicated region
    $region30: #{feed_forward.1} parent=1 // pred_check
      _
    $region31: #{feed_forward.1} parent=1 // pred_check_branch
      %60 = sbr.rel (0) target = $region33
    $region32: #{feed_forward.1} parent=1 // pred_region
      %61 = dma.done [#allocation6], 8192
    $region33: #{feed_forward.1} parent=1 // pred_fallthru
      _
    %v62 = vld [vmem:[#allocation2] sm:$0xff]
    %v63 = vld [vmem:[#allocation2 + $0x8] sm:$0xff]
    %v64 = vld [vmem:[#allocation2 + $0x10] sm:$0xff]
    %v65 = vld [vmem:[#allocation2 + $0x18] sm:$0xff]
    %v66 = vpack.c.bf16 %v64, %v62
    %v67 = vpack.c.bf16 %v65, %v63
    %v68 = vld [vmem:[#allocation5] sm:$0xff]
    %v69 = vld [vmem:[#allocation5 + $0x8] sm:$0xff]
    %v70 = vld [vmem:[#allocation5 + $0x10] sm:$0xff]
    %v71 = vld [vmem:[#allocation5 + $0x18] sm:$0xff]
    %v72 = vld [vmem:[#allocation5 + $0x20] sm:$0xff]
    %v73 = vld [vmem:[#allocation5 + $0x28] sm:$0xff]
    %v74 = vld [vmem:[#allocation5 + $0x30] sm:$0xff]
    %v75 = vld [vmem:[#allocation5 + $0x38] sm:$0xff]
    %v76 = vld [vmem:[#allocation5 + $0x40] sm:$0xff]
    %v77 = vld [vmem:[#allocation5 + $0x48] sm:$0xff]
    %v78 = vld [vmem:[#allocation5 + $0x50] sm:$0xff]
    %v79 = vld [vmem:[#allocation5 + $0x58] sm:$0xff]
    %v80 = vld [vmem:[#allocation5 + $0x60] sm:$0xff]
    %v81 = vld [vmem:[#allocation5 + $0x68] sm:$0xff]
    %v82 = vld [vmem:[#allocation5 + $0x70] sm:$0xff]
    %v83 = vld [vmem:[#allocation5 + $0x78] sm:$0xff]
    %v84 = vld [vmem:[#allocation5 + $0x80] sm:$0xff]
    %v85 = vld [vmem:[#allocation5 + $0x88] sm:$0xff]
    %v86 = vld [vmem:[#allocation5 + $0x90] sm:$0xff]
    %v87 = vld [vmem:[#allocation5 + $0x98] sm:$0xff]
    %v88 = vld [vmem:[#allocation5 + $0xa0] sm:$0xff]
    %v89 = vld [vmem:[#allocation5 + $0xa8] sm:$0xff]
    %v90 = vld [vmem:[#allocation5 + $0xb0] sm:$0xff]
    %v91 = vld [vmem:[#allocation5 + $0xb8] sm:$0xff]
    %v92 = vld [vmem:[#allocation5 + $0xc0] sm:$0xff]
    %v93 = vld [vmem:[#allocation5 + $0xc8] sm:$0xff]
    %v94 = vld [vmem:[#allocation5 + $0xd0] sm:$0xff]
    %v95 = vld [vmem:[#allocation5 + $0xd8] sm:$0xff]
    %v96 = vld [vmem:[#allocation5 + $0xe0] sm:$0xff]
    %v97 = vld [vmem:[#allocation5 + $0xe8] sm:$0xff]
    %v98 = vld [vmem:[#allocation5 + $0xf0] sm:$0xff]
    %v99 = vld [vmem:[#allocation5 + $0xf8] sm:$0xff]
    %v100 = vld [vmem:[#allocation5 + $0x100] sm:$0xff]
    %v101 = vld [vmem:[#allocation5 + $0x108] sm:$0xff]
    %v102 = vld [vmem:[#allocation5 + $0x110] sm:$0xff]
    %v103 = vld [vmem:[#allocation5 + $0x118] sm:$0xff]
    %v104 = vld [vmem:[#allocation5 + $0x120] sm:$0xff]
    %v105 = vld [vmem:[#allocation5 + $0x128] sm:$0xff]
    %v106 = vld [vmem:[#allocation5 + $0x130] sm:$0xff]
    %v107 = vld [vmem:[#allocation5 + $0x138] sm:$0xff]
    %v108 = vld [vmem:[#allocation5 + $0x140] sm:$0xff]
    %v109 = vld [vmem:[#allocation5 + $0x148] sm:$0xff]
    %v110 = vld [vmem:[#allocation5 + $0x150] sm:$0xff]
    %v111 = vld [vmem:[#allocation5 + $0x158] sm:$0xff]
    %v112 = vld [vmem:[#allocation5 + $0x160] sm:$0xff]
    %v113 = vld [vmem:[#allocation5 + $0x168] sm:$0xff]
    %v114 = vld [vmem:[#allocation5 + $0x170] sm:$0xff]
    %v115 = vld [vmem:[#allocation5 + $0x178] sm:$0xff]
    %v116 = vld [vmem:[#allocation5 + $0x180] sm:$0xff]
    %v117 = vld [vmem:[#allocation5 + $0x188] sm:$0xff]
    %v118 = vld [vmem:[#allocation5 + $0x190] sm:$0xff]
    %v119 = vld [vmem:[#allocation5 + $0x198] sm:$0xff]
    %v120 = vld [vmem:[#allocation5 + $0x1a0] sm:$0xff]
    %v121 = vld [vmem:[#allocation5 + $0x1a8] sm:$0xff]
    %v122 = vld [vmem:[#allocation5 + $0x1b0] sm:$0xff]
    %v123 = vld [vmem:[#allocation5 + $0x1b8] sm:$0xff]
    %v124 = vld [vmem:[#allocation5 + $0x1c0] sm:$0xff]
    %v125 = vld [vmem:[#allocation5 + $0x1c8] sm:$0xff]
    %v126 = vld [vmem:[#allocation5 + $0x1d0] sm:$0xff]
    %v127 = vld [vmem:[#allocation5 + $0x1d8] sm:$0xff]
    %v128 = vld [vmem:[#allocation5 + $0x1e0] sm:$0xff]
    %v129 = vld [vmem:[#allocation5 + $0x1e8] sm:$0xff]
    %v130 = vld [vmem:[#allocation5 + $0x1f0] sm:$0xff]
    %v131 = vld [vmem:[#allocation5 + $0x1f8] sm:$0xff]
    %v132 = vld [vmem:[%s2] sm:$0xf]
    %v134 = vlaneseq
    %v135 = vshrl.u32 %v134, 7
    %v136 = vsub.s32 0, %v135
    %v137 = vrot.slane %v132, %v136
    %v138 = vlaneseq
    %v139 = vshrl.u32 %v138, 7
    %v140 = vsub.s32 1, %v139
    %v141 = vrot.slane %v132, %v140
    %v142 = vlaneseq
    %v143 = vshrl.u32 %v142, 7
    %v144 = vsub.s32 2, %v143
    %v145 = vrot.slane %v132, %v144
    %v146 = vlaneseq
    %v147 = vshrl.u32 %v146, 7
    %v148 = vsub.s32 3, %v147
    %v149 = vrot.slane %v132, %v148
    %v218 = vunpack.c.l.b16 %v68
    %v219 = vunpack.c.h.b16 %v68
    %v220 = vunpack.c.l.b16 %v69
    %v221 = vunpack.c.h.b16 %v69
    %v222 = vunpack.c.l.b16 %v70
    %v223 = vunpack.c.h.b16 %v70
    %v224 = vunpack.c.l.b16 %v71
    %v225 = vunpack.c.h.b16 %v71
    %v226 = vunpack.c.l.b16 %v72
    %v227 = vunpack.c.h.b16 %v72
    %v228 = vunpack.c.l.b16 %v73
    %v229 = vunpack.c.h.b16 %v73
    %v230 = vunpack.c.l.b16 %v74
    %v231 = vunpack.c.h.b16 %v74
    %v232 = vunpack.c.l.b16 %v75
    %v233 = vunpack.c.h.b16 %v75
    %v234 = vunpack.c.l.b16 %v76
    %v235 = vunpack.c.h.b16 %v76
    %v236 = vunpack.c.l.b16 %v77
    %v237 = vunpack.c.h.b16 %v77
    %v238 = vunpack.c.l.b16 %v78
    %v239 = vunpack.c.h.b16 %v78
    %v240 = vunpack.c.l.b16 %v79
    %v241 = vunpack.c.h.b16 %v79
    %v242 = vunpack.c.l.b16 %v80
    %v243 = vunpack.c.h.b16 %v80
    %v244 = vunpack.c.l.b16 %v81
    %v245 = vunpack.c.h.b16 %v81
    %v246 = vunpack.c.l.b16 %v82
    %v247 = vunpack.c.h.b16 %v82
    %v248 = vunpack.c.l.b16 %v83
    %v249 = vunpack.c.h.b16 %v83
    %v250 = vunpack.c.l.b16 %v84
    %v251 = vunpack.c.h.b16 %v84
    %v252 = vunpack.c.l.b16 %v85
    %v253 = vunpack.c.h.b16 %v85
    %v254 = vunpack.c.l.b16 %v86
    %v255 = vunpack.c.h.b16 %v86
    %v256 = vunpack.c.l.b16 %v87
    %v257 = vunpack.c.h.b16 %v87
    %v258 = vunpack.c.l.b16 %v88
    %v259 = vunpack.c.h.b16 %v88
    %v260 = vunpack.c.l.b16 %v89
    %v261 = vunpack.c.h.b16 %v89
    %v262 = vunpack.c.l.b16 %v90
    %v263 = vunpack.c.h.b16 %v90
    %v264 = vunpack.c.l.b16 %v91
    %v265 = vunpack.c.h.b16 %v91
    %v266 = vunpack.c.l.b16 %v92
    %v267 = vunpack.c.h.b16 %v92
    %v268 = vunpack.c.l.b16 %v93
    %v269 = vunpack.c.h.b16 %v93
    %v270 = vunpack.c.l.b16 %v94
    %v271 = vunpack.c.h.b16 %v94
    %v272 = vunpack.c.l.b16 %v95
    %v273 = vunpack.c.h.b16 %v95
    %v274 = vunpack.c.l.b16 %v96
    %v275 = vunpack.c.h.b16 %v96
    %v276 = vunpack.c.l.b16 %v97
    %v277 = vunpack.c.h.b16 %v97
    %v278 = vunpack.c.l.b16 %v98
    %v279 = vunpack.c.h.b16 %v98
    %v280 = vunpack.c.l.b16 %v99
    %v281 = vunpack.c.h.b16 %v99
    %v282 = vunpack.c.l.b16 %v100
    %v283 = vunpack.c.h.b16 %v100
    %v284 = vunpack.c.l.b16 %v101
    %v285 = vunpack.c.h.b16 %v101
    %v286 = vunpack.c.l.b16 %v102
    %v287 = vunpack.c.h.b16 %v102
    %v288 = vunpack.c.l.b16 %v103
    %v289 = vunpack.c.h.b16 %v103
    %v290 = vunpack.c.l.b16 %v104
    %v291 = vunpack.c.h.b16 %v104
    %v292 = vunpack.c.l.b16 %v105
    %v293 = vunpack.c.h.b16 %v105
    %v294 = vunpack.c.l.b16 %v106
    %v295 = vunpack.c.h.b16 %v106
    %v296 = vunpack.c.l.b16 %v107
    %v297 = vunpack.c.h.b16 %v107
    %v298 = vunpack.c.l.b16 %v108
    %v299 = vunpack.c.h.b16 %v108
    %v300 = vunpack.c.l.b16 %v109
    %v301 = vunpack.c.h.b16 %v109
    %v302 = vunpack.c.l.b16 %v110
    %v303 = vunpack.c.h.b16 %v110
    %v304 = vunpack.c.l.b16 %v111
    %v305 = vunpack.c.h.b16 %v111
    %v306 = vunpack.c.l.b16 %v112
    %v307 = vunpack.c.h.b16 %v112
    %v308 = vunpack.c.l.b16 %v113
    %v309 = vunpack.c.h.b16 %v113
    %v310 = vunpack.c.l.b16 %v114
    %v311 = vunpack.c.h.b16 %v114
    %v312 = vunpack.c.l.b16 %v115
    %v313 = vunpack.c.h.b16 %v115
    %v314 = vunpack.c.l.b16 %v116
    %v315 = vunpack.c.h.b16 %v116
    %v316 = vunpack.c.l.b16 %v117
    %v317 = vunpack.c.h.b16 %v117
    %v318 = vunpack.c.l.b16 %v118
    %v319 = vunpack.c.h.b16 %v118
    %v320 = vunpack.c.l.b16 %v119
    %v321 = vunpack.c.h.b16 %v119
    %v322 = vunpack.c.l.b16 %v120
    %v323 = vunpack.c.h.b16 %v120
    %v324 = vunpack.c.l.b16 %v121
    %v325 = vunpack.c.h.b16 %v121
    %v326 = vunpack.c.l.b16 %v122
    %v327 = vunpack.c.h.b16 %v122
    %v328 = vunpack.c.l.b16 %v123
    %v329 = vunpack.c.h.b16 %v123
    %v330 = vunpack.c.l.b16 %v124
    %v331 = vunpack.c.h.b16 %v124
    %v332 = vunpack.c.l.b16 %v125
    %v333 = vunpack.c.h.b16 %v125
    %v334 = vunpack.c.l.b16 %v126
    %v335 = vunpack.c.h.b16 %v126
    %v336 = vunpack.c.l.b16 %v127
    %v337 = vunpack.c.h.b16 %v127
    %v338 = vunpack.c.l.b16 %v128
    %v339 = vunpack.c.h.b16 %v128
    %v340 = vunpack.c.l.b16 %v129
    %v341 = vunpack.c.h.b16 %v129
    %v342 = vunpack.c.l.b16 %v130
    %v343 = vunpack.c.h.b16 %v130
    %v344 = vunpack.c.l.b16 %v131
    %v345 = vunpack.c.h.b16 %v131
    %v346 = vpack.c.b16 %v222, %v218
    %v347 = vpack.c.b16 %v223, %v219
    %v348 = vpack.c.b16 %v224, %v220
    %v349 = vpack.c.b16 %v225, %v221
    %v350 = vpack.c.b16 %v230, %v226
    %v351 = vpack.c.b16 %v231, %v227
    %v352 = vpack.c.b16 %v232, %v228
    %v353 = vpack.c.b16 %v233, %v229
    %v354 = vpack.c.b16 %v238, %v234
    %v355 = vpack.c.b16 %v239, %v235
    %v356 = vpack.c.b16 %v240, %v236
    %v357 = vpack.c.b16 %v241, %v237
    %v358 = vpack.c.b16 %v246, %v242
    %v359 = vpack.c.b16 %v247, %v243
    %v360 = vpack.c.b16 %v248, %v244
    %v361 = vpack.c.b16 %v249, %v245
    %v362 = vpack.c.b16 %v254, %v250
    %v363 = vpack.c.b16 %v255, %v251
    %v364 = vpack.c.b16 %v256, %v252
    %v365 = vpack.c.b16 %v257, %v253
    %v366 = vpack.c.b16 %v262, %v258
    %v367 = vpack.c.b16 %v263, %v259
    %v368 = vpack.c.b16 %v264, %v260
    %v369 = vpack.c.b16 %v265, %v261
    %v370 = vpack.c.b16 %v270, %v266
    %v371 = vpack.c.b16 %v271, %v267
    %v372 = vpack.c.b16 %v272, %v268
    %v373 = vpack.c.b16 %v273, %v269
    %v374 = vpack.c.b16 %v278, %v274
    %v375 = vpack.c.b16 %v279, %v275
    %v376 = vpack.c.b16 %v280, %v276
    %v377 = vpack.c.b16 %v281, %v277
    %v378 = vpack.c.b16 %v286, %v282
    %v379 = vpack.c.b16 %v287, %v283
    %v380 = vpack.c.b16 %v288, %v284
    %v381 = vpack.c.b16 %v289, %v285
    %v382 = vpack.c.b16 %v294, %v290
    %v383 = vpack.c.b16 %v295, %v291
    %v384 = vpack.c.b16 %v296, %v292
    %v385 = vpack.c.b16 %v297, %v293
    %v386 = vpack.c.b16 %v302, %v298
    %v387 = vpack.c.b16 %v303, %v299
    %v388 = vpack.c.b16 %v304, %v300
    %v389 = vpack.c.b16 %v305, %v301
    %v390 = vpack.c.b16 %v310, %v306
    %v391 = vpack.c.b16 %v311, %v307
    %v392 = vpack.c.b16 %v312, %v308
    %v393 = vpack.c.b16 %v313, %v309
    %v394 = vpack.c.b16 %v318, %v314
    %v395 = vpack.c.b16 %v319, %v315
    %v396 = vpack.c.b16 %v320, %v316
    %v397 = vpack.c.b16 %v321, %v317
    %v398 = vpack.c.b16 %v326, %v322
    %v399 = vpack.c.b16 %v327, %v323
    %v400 = vpack.c.b16 %v328, %v324
    %v401 = vpack.c.b16 %v329, %v325
    %v402 = vpack.c.b16 %v334, %v330
    %v403 = vpack.c.b16 %v335, %v331
    %v404 = vpack.c.b16 %v336, %v332
    %v405 = vpack.c.b16 %v337, %v333
    %v406 = vpack.c.b16 %v342, %v338
    %v407 = vpack.c.b16 %v343, %v339
    %v408 = vpack.c.b16 %v344, %v340
    %v409 = vpack.c.b16 %v345, %v341
    %474 = vmatprep.subr.bf16.mxu0 %v347
    %475 = vmatpush1.bf16.msra.mxu0 %v346
    %476 = vmatprep.subr.bf16.mxu0 %v351
    %477 = vmatpush1.bf16.msra.mxu0 %v350
    %478 = vmatprep.subr.bf16.mxu0 %v355
    %479 = vmatpush1.bf16.msra.mxu0 %v354
    %480 = vmatprep.subr.bf16.mxu0 %v359
    %481 = vmatpush1.bf16.msra.mxu0 %v358
    %482 = vmatprep.subr.bf16.mxu0 %v363
    %483 = vmatpush1.bf16.msra.mxu0 %v362
    %484 = vmatprep.subr.bf16.mxu0 %v367
    %485 = vmatpush1.bf16.msra.mxu0 %v366
    %486 = vmatprep.subr.bf16.mxu0 %v371
    %487 = vmatpush1.bf16.msra.mxu0 %v370
    %488 = vmatprep.subr.bf16.mxu0 %v375
    %489 = vmatpush1.bf16.msra.mxu0 %v374
    %490 = vmatprep.subr.bf16.mxu0 %v379
    %491 = vmatpush1.bf16.msra.mxu0 %v378
    %492 = vmatprep.subr.bf16.mxu0 %v383
    %493 = vmatpush1.bf16.msra.mxu0 %v382
    %494 = vmatprep.subr.bf16.mxu0 %v387
    %495 = vmatpush1.bf16.msra.mxu0 %v386
    %496 = vmatprep.subr.bf16.mxu0 %v391
    %497 = vmatpush1.bf16.msra.mxu0 %v390
    %498 = vmatprep.subr.bf16.mxu0 %v395
    %499 = vmatpush1.bf16.msra.mxu0 %v394
    %500 = vmatprep.subr.bf16.mxu0 %v399
    %501 = vmatpush1.bf16.msra.mxu0 %v398
    %502 = vmatprep.subr.bf16.mxu0 %v403
    %503 = vmatpush1.bf16.msra.mxu0 %v402
    %504 = vmatprep.subr.bf16.mxu0 %v407
    %505 = vmatpush1.bf16.msra.mxu0 %v406
    %506 = vmatprep.mubr.bf16.mxu0 %v67
    %507 = vmatmul.mubr.bf16.gmra.mrb[0].mxu0 %v66
    %v508 = vpop.f32.mrb[0].mxu0
    %v509 = vadd.f32 %v137, %v508
    %v510 = vpop.f32.mrb[0].mxu0
    %v511 = vadd.f32 %v141, %v510
    %v512 = vpop.f32.mrb[0].mxu0
    %v513 = vadd.f32 %v137, %v512
    %v514 = vpop.f32.mrb[0].mxu0
    %v515 = vadd.f32 %v141, %v514
    %516 = vdwg.mxu0
    %517 = vmatprep.subr.bf16.mxu0 %v349
    %518 = vmatpush1.bf16.msra.mxu0 %v348
    %519 = vmatprep.subr.bf16.mxu0 %v353
    %520 = vmatpush1.bf16.msra.mxu0 %v352
    %521 = vmatprep.subr.bf16.mxu0 %v357
    %522 = vmatpush1.bf16.msra.mxu0 %v356
    %523 = vmatprep.subr.bf16.mxu0 %v361
    %524 = vmatpush1.bf16.msra.mxu0 %v360
    %525 = vmatprep.subr.bf16.mxu0 %v365
    %526 = vmatpush1.bf16.msra.mxu0 %v364
    %527 = vmatprep.subr.bf16.mxu0 %v369
    %528 = vmatpush1.bf16.msra.mxu0 %v368
    %529 = vmatprep.subr.bf16.mxu0 %v373
    %530 = vmatpush1.bf16.msra.mxu0 %v372
    %531 = vmatprep.subr.bf16.mxu0 %v377
    %532 = vmatpush1.bf16.msra.mxu0 %v376
    %533 = vmatprep.subr.bf16.mxu0 %v381
    %534 = vmatpush1.bf16.msra.mxu0 %v380
    %535 = vmatprep.subr.bf16.mxu0 %v385
    %536 = vmatpush1.bf16.msra.mxu0 %v384
    %537 = vmatprep.subr.bf16.mxu0 %v389
    %538 = vmatpush1.bf16.msra.mxu0 %v388
    %539 = vmatprep.subr.bf16.mxu0 %v393
    %540 = vmatpush1.bf16.msra.mxu0 %v392
    %541 = vmatprep.subr.bf16.mxu0 %v397
    %542 = vmatpush1.bf16.msra.mxu0 %v396
    %543 = vmatprep.subr.bf16.mxu0 %v401
    %544 = vmatpush1.bf16.msra.mxu0 %v400
    %545 = vmatprep.subr.bf16.mxu0 %v405
    %546 = vmatpush1.bf16.msra.mxu0 %v404
    %547 = vmatprep.subr.bf16.mxu0 %v409
    %548 = vmatpush1.bf16.msra.mxu0 %v408
    %549 = vmatprep.mubr.bf16.mxu0 %v67
    %550 = vmatmul.mubr.bf16.gmra.mrb[0].mxu0 %v66
    %v551 = vpop.f32.mrb[0].mxu0
    %v552 = vadd.f32 %v145, %v551
    %v553 = vpop.f32.mrb[0].mxu0
    %v554 = vadd.f32 %v149, %v553
    %v555 = vpop.f32.mrb[0].mxu0
    %v556 = vadd.f32 %v145, %v555
    %v557 = vpop.f32.mrb[0].mxu0
    %v558 = vadd.f32 %v149, %v557
    %559 = vdwg.mxu0
    %v560 = vmul.f32 %v509, 0.5
    %v561 = vmul.f32 %v511, 0.5
    %v562 = vmul.f32 %v552, 0.5
    %v563 = vmul.f32 %v554, 0.5
    %v564 = vmul.f32 %v513, 0.5
    %v565 = vmul.f32 %v515, 0.5
    %v566 = vmul.f32 %v556, 0.5
    %v567 = vmul.f32 %v558, 0.5
    %v568 = vmul.f32 %v509, 0.70710677
    %v569 = vmul.f32 %v511, 0.70710677
    %v570 = vmul.f32 %v552, 0.70710677
    %v571 = vmul.f32 %v554, 0.70710677
    %v572 = vmul.f32 %v513, 0.70710677
    %v573 = vmul.f32 %v515, 0.70710677
    %v574 = vmul.f32 %v556, 0.70710677
    %v575 = vmul.f32 %v558, 0.70710677
    %v576 = verf.f32.pop %v568
    %v577 = verf.f32.pop %v569
    %v578 = verf.f32.pop %v570
    %v579 = verf.f32.pop %v571
    %v580 = verf.f32.pop %v572
    %v581 = verf.f32.pop %v573
    %v582 = verf.f32.pop %v574
    %v583 = verf.f32.pop %v575
    %v584 = vadd.f32 %v576, 1.0
    %v585 = vadd.f32 %v577, 1.0
    %v586 = vadd.f32 %v578, 1.0
    %v587 = vadd.f32 %v579, 1.0
    %v588 = vadd.f32 %v580, 1.0
    %v589 = vadd.f32 %v581, 1.0
    %v590 = vadd.f32 %v582, 1.0
    %v591 = vadd.f32 %v583, 1.0
    %v592 = vmul.f32 %v560, %v584
    %v593 = vmul.f32 %v561, %v585
    %v594 = vmul.f32 %v562, %v586
    %v595 = vmul.f32 %v563, %v587
    %v596 = vmul.f32 %v564, %v588
    %v597 = vmul.f32 %v565, %v589
    %v598 = vmul.f32 %v566, %v590
    %v599 = vmul.f32 %v567, %v591
    %v600 = vpack.c.bf16 %v596, %v592
    %v601 = vpack.c.bf16 %v597, %v593
    %v602 = vpack.c.bf16 %v598, %v594
    %v603 = vpack.c.bf16 %v599, %v595
    %v604 = vld [vmem:[#allocation7] sm:$0xff]
    %v605 = vld [vmem:[#allocation7 + $0x8] sm:$0xff]
    %v606 = vld [vmem:[#allocation7 + $0x10] sm:$0xff]
    %v607 = vld [vmem:[#allocation7 + $0x18] sm:$0xff]
    %v608 = vld [vmem:[#allocation7 + $0x20] sm:$0xff]
    %v609 = vld [vmem:[#allocation7 + $0x28] sm:$0xff]
    %v610 = vld [vmem:[#allocation7 + $0x30] sm:$0xff]
    %v611 = vld [vmem:[#allocation7 + $0x38] sm:$0xff]
    %v612 = vld [vmem:[#allocation7 + $0x40] sm:$0xff]
    %v613 = vld [vmem:[#allocation7 + $0x48] sm:$0xff]
    %v614 = vld [vmem:[#allocation7 + $0x50] sm:$0xff]
    %v615 = vld [vmem:[#allocation7 + $0x58] sm:$0xff]
    %v616 = vld [vmem:[#allocation7 + $0x60] sm:$0xff]
    %v617 = vld [vmem:[#allocation7 + $0x68] sm:$0xff]
    %v618 = vld [vmem:[#allocation7 + $0x70] sm:$0xff]
    %v619 = vld [vmem:[#allocation7 + $0x78] sm:$0xff]
    %v620 = vld [vmem:[#allocation7 + $0x80] sm:$0xff]
    %v621 = vld [vmem:[#allocation7 + $0x88] sm:$0xff]
    %v622 = vld [vmem:[#allocation7 + $0x90] sm:$0xff]
    %v623 = vld [vmem:[#allocation7 + $0x98] sm:$0xff]
    %v624 = vld [vmem:[#allocation7 + $0xa0] sm:$0xff]
    %v625 = vld [vmem:[#allocation7 + $0xa8] sm:$0xff]
    %v626 = vld [vmem:[#allocation7 + $0xb0] sm:$0xff]
    %v627 = vld [vmem:[#allocation7 + $0xb8] sm:$0xff]
    %v628 = vld [vmem:[#allocation7 + $0xc0] sm:$0xff]
    %v629 = vld [vmem:[#allocation7 + $0xc8] sm:$0xff]
    %v630 = vld [vmem:[#allocation7 + $0xd0] sm:$0xff]
    %v631 = vld [vmem:[#allocation7 + $0xd8] sm:$0xff]
    %v632 = vld [vmem:[#allocation7 + $0xe0] sm:$0xff]
    %v633 = vld [vmem:[#allocation7 + $0xe8] sm:$0xff]
    %v634 = vld [vmem:[#allocation7 + $0xf0] sm:$0xff]
    %v635 = vld [vmem:[#allocation7 + $0xf8] sm:$0xff]
    %v636 = vld [vmem:[#allocation7 + $0x100] sm:$0xff]
    %v637 = vld [vmem:[#allocation7 + $0x108] sm:$0xff]
    %v638 = vld [vmem:[#allocation7 + $0x110] sm:$0xff]
    %v639 = vld [vmem:[#allocation7 + $0x118] sm:$0xff]
    %v640 = vld [vmem:[#allocation7 + $0x120] sm:$0xff]
    %v641 = vld [vmem:[#allocation7 + $0x128] sm:$0xff]
    %v642 = vld [vmem:[#allocation7 + $0x130] sm:$0xff]
    %v643 = vld [vmem:[#allocation7 + $0x138] sm:$0xff]
    %v644 = vld [vmem:[#allocation7 + $0x140] sm:$0xff]
    %v645 = vld [vmem:[#allocation7 + $0x148] sm:$0xff]
    %v646 = vld [vmem:[#allocation7 + $0x150] sm:$0xff]
    %v647 = vld [vmem:[#allocation7 + $0x158] sm:$0xff]
    %v648 = vld [vmem:[#allocation7 + $0x160] sm:$0xff]
    %v649 = vld [vmem:[#allocation7 + $0x168] sm:$0xff]
    %v650 = vld [vmem:[#allocation7 + $0x170] sm:$0xff]
    %v651 = vld [vmem:[#allocation7 + $0x178] sm:$0xff]
    %v652 = vld [vmem:[#allocation7 + $0x180] sm:$0xff]
    %v653 = vld [vmem:[#allocation7 + $0x188] sm:$0xff]
    %v654 = vld [vmem:[#allocation7 + $0x190] sm:$0xff]
    %v655 = vld [vmem:[#allocation7 + $0x198] sm:$0xff]
    %v656 = vld [vmem:[#allocation7 + $0x1a0] sm:$0xff]
    %v657 = vld [vmem:[#allocation7 + $0x1a8] sm:$0xff]
    %v658 = vld [vmem:[#allocation7 + $0x1b0] sm:$0xff]
    %v659 = vld [vmem:[#allocation7 + $0x1b8] sm:$0xff]
    %v660 = vld [vmem:[#allocation7 + $0x1c0] sm:$0xff]
    %v661 = vld [vmem:[#allocation7 + $0x1c8] sm:$0xff]
    %v662 = vld [vmem:[#allocation7 + $0x1d0] sm:$0xff]
    %v663 = vld [vmem:[#allocation7 + $0x1d8] sm:$0xff]
    %v664 = vld [vmem:[#allocation7 + $0x1e0] sm:$0xff]
    %v665 = vld [vmem:[#allocation7 + $0x1e8] sm:$0xff]
    %v666 = vld [vmem:[#allocation7 + $0x1f0] sm:$0xff]
    %v667 = vld [vmem:[#allocation7 + $0x1f8] sm:$0xff]
    %v668 = vld [vmem:[%s4] sm:$0x3]
    %v670 = vlaneseq
    %v671 = vshrl.u32 %v670, 7
    %v672 = vsub.s32 0, %v671
    %v673 = vrot.slane %v668, %v672
    %v674 = vlaneseq
    %v675 = vshrl.u32 %v674, 7
    %v676 = vsub.s32 1, %v675
    %v677 = vrot.slane %v668, %v676
    %v744 = vunpack.c.l.b16 %v604
    %v745 = vunpack.c.h.b16 %v604
    %v746 = vunpack.c.l.b16 %v605
    %v747 = vunpack.c.h.b16 %v605
    %v748 = vunpack.c.l.b16 %v606
    %v749 = vunpack.c.h.b16 %v606
    %v750 = vunpack.c.l.b16 %v607
    %v751 = vunpack.c.h.b16 %v607
    %v752 = vunpack.c.l.b16 %v608
    %v753 = vunpack.c.h.b16 %v608
    %v754 = vunpack.c.l.b16 %v609
    %v755 = vunpack.c.h.b16 %v609
    %v756 = vunpack.c.l.b16 %v610
    %v757 = vunpack.c.h.b16 %v610
    %v758 = vunpack.c.l.b16 %v611
    %v759 = vunpack.c.h.b16 %v611
    %v760 = vunpack.c.l.b16 %v612
    %v761 = vunpack.c.h.b16 %v612
    %v762 = vunpack.c.l.b16 %v613
    %v763 = vunpack.c.h.b16 %v613
    %v764 = vunpack.c.l.b16 %v614
    %v765 = vunpack.c.h.b16 %v614
    %v766 = vunpack.c.l.b16 %v615
    %v767 = vunpack.c.h.b16 %v615
    %v768 = vunpack.c.l.b16 %v616
    %v769 = vunpack.c.h.b16 %v616
    %v770 = vunpack.c.l.b16 %v617
    %v771 = vunpack.c.h.b16 %v617
    %v772 = vunpack.c.l.b16 %v618
    %v773 = vunpack.c.h.b16 %v618
    %v774 = vunpack.c.l.b16 %v619
    %v775 = vunpack.c.h.b16 %v619
    %v776 = vunpack.c.l.b16 %v620
    %v777 = vunpack.c.h.b16 %v620
    %v778 = vunpack.c.l.b16 %v621
    %v779 = vunpack.c.h.b16 %v621
    %v780 = vunpack.c.l.b16 %v622
    %v781 = vunpack.c.h.b16 %v622
    %v782 = vunpack.c.l.b16 %v623
    %v783 = vunpack.c.h.b16 %v623
    %v784 = vunpack.c.l.b16 %v624
    %v785 = vunpack.c.h.b16 %v624
    %v786 = vunpack.c.l.b16 %v625
    %v787 = vunpack.c.h.b16 %v625
    %v788 = vunpack.c.l.b16 %v626
    %v789 = vunpack.c.h.b16 %v626
    %v790 = vunpack.c.l.b16 %v627
    %v791 = vunpack.c.h.b16 %v627
    %v792 = vunpack.c.l.b16 %v628
    %v793 = vunpack.c.h.b16 %v628
    %v794 = vunpack.c.l.b16 %v629
    %v795 = vunpack.c.h.b16 %v629
    %v796 = vunpack.c.l.b16 %v630
    %v797 = vunpack.c.h.b16 %v630
    %v798 = vunpack.c.l.b16 %v631
    %v799 = vunpack.c.h.b16 %v631
    %v800 = vunpack.c.l.b16 %v632
    %v801 = vunpack.c.h.b16 %v632
    %v802 = vunpack.c.l.b16 %v633
    %v803 = vunpack.c.h.b16 %v633
    %v804 = vunpack.c.l.b16 %v634
    %v805 = vunpack.c.h.b16 %v634
    %v806 = vunpack.c.l.b16 %v635
    %v807 = vunpack.c.h.b16 %v635
    %v808 = vunpack.c.l.b16 %v636
    %v809 = vunpack.c.h.b16 %v636
    %v810 = vunpack.c.l.b16 %v637
    %v811 = vunpack.c.h.b16 %v637
    %v812 = vunpack.c.l.b16 %v638
    %v813 = vunpack.c.h.b16 %v638
    %v814 = vunpack.c.l.b16 %v639
    %v815 = vunpack.c.h.b16 %v639
    %v816 = vunpack.c.l.b16 %v640
    %v817 = vunpack.c.h.b16 %v640
    %v818 = vunpack.c.l.b16 %v641
    %v819 = vunpack.c.h.b16 %v641
    %v820 = vunpack.c.l.b16 %v642
    %v821 = vunpack.c.h.b16 %v642
    %v822 = vunpack.c.l.b16 %v643
    %v823 = vunpack.c.h.b16 %v643
    %v824 = vunpack.c.l.b16 %v644
    %v825 = vunpack.c.h.b16 %v644
    %v826 = vunpack.c.l.b16 %v645
    %v827 = vunpack.c.h.b16 %v645
    %v828 = vunpack.c.l.b16 %v646
    %v829 = vunpack.c.h.b16 %v646
    %v830 = vunpack.c.l.b16 %v647
    %v831 = vunpack.c.h.b16 %v647
    %v832 = vunpack.c.l.b16 %v648
    %v833 = vunpack.c.h.b16 %v648
    %v834 = vunpack.c.l.b16 %v649
    %v835 = vunpack.c.h.b16 %v649
    %v836 = vunpack.c.l.b16 %v650
    %v837 = vunpack.c.h.b16 %v650
    %v838 = vunpack.c.l.b16 %v651
    %v839 = vunpack.c.h.b16 %v651
    %v840 = vunpack.c.l.b16 %v652
    %v841 = vunpack.c.h.b16 %v652
    %v842 = vunpack.c.l.b16 %v653
    %v843 = vunpack.c.h.b16 %v653
    %v844 = vunpack.c.l.b16 %v654
    %v845 = vunpack.c.h.b16 %v654
    %v846 = vunpack.c.l.b16 %v655
    %v847 = vunpack.c.h.b16 %v655
    %v848 = vunpack.c.l.b16 %v656
    %v849 = vunpack.c.h.b16 %v656
    %v850 = vunpack.c.l.b16 %v657
    %v851 = vunpack.c.h.b16 %v657
    %v852 = vunpack.c.l.b16 %v658
    %v853 = vunpack.c.h.b16 %v658
    %v854 = vunpack.c.l.b16 %v659
    %v855 = vunpack.c.h.b16 %v659
    %v856 = vunpack.c.l.b16 %v660
    %v857 = vunpack.c.h.b16 %v660
    %v858 = vunpack.c.l.b16 %v661
    %v859 = vunpack.c.h.b16 %v661
    %v860 = vunpack.c.l.b16 %v662
    %v861 = vunpack.c.h.b16 %v662
    %v862 = vunpack.c.l.b16 %v663
    %v863 = vunpack.c.h.b16 %v663
    %v864 = vunpack.c.l.b16 %v664
    %v865 = vunpack.c.h.b16 %v664
    %v866 = vunpack.c.l.b16 %v665
    %v867 = vunpack.c.h.b16 %v665
    %v868 = vunpack.c.l.b16 %v666
    %v869 = vunpack.c.h.b16 %v666
    %v870 = vunpack.c.l.b16 %v667
    %v871 = vunpack.c.h.b16 %v667
    %v872 = vpack.c.b16 %v746, %v744
    %v873 = vpack.c.b16 %v747, %v745
    %v874 = vpack.c.b16 %v750, %v748
    %v875 = vpack.c.b16 %v751, %v749
    %v876 = vpack.c.b16 %v754, %v752
    %v877 = vpack.c.b16 %v755, %v753
    %v878 = vpack.c.b16 %v758, %v756
    %v879 = vpack.c.b16 %v759, %v757
    %v880 = vpack.c.b16 %v762, %v760
    %v881 = vpack.c.b16 %v763, %v761
    %v882 = vpack.c.b16 %v766, %v764
    %v883 = vpack.c.b16 %v767, %v765
    %v884 = vpack.c.b16 %v770, %v768
    %v885 = vpack.c.b16 %v771, %v769
    %v886 = vpack.c.b16 %v774, %v772
    %v887 = vpack.c.b16 %v775, %v773
    %v888 = vpack.c.b16 %v778, %v776
    %v889 = vpack.c.b16 %v779, %v777
    %v890 = vpack.c.b16 %v782, %v780
    %v891 = vpack.c.b16 %v783, %v781
    %v892 = vpack.c.b16 %v786, %v784
    %v893 = vpack.c.b16 %v787, %v785
    %v894 = vpack.c.b16 %v790, %v788
    %v895 = vpack.c.b16 %v791, %v789
    %v896 = vpack.c.b16 %v794, %v792
    %v897 = vpack.c.b16 %v795, %v793
    %v898 = vpack.c.b16 %v798, %v796
    %v899 = vpack.c.b16 %v799, %v797
    %v900 = vpack.c.b16 %v802, %v800
    %v901 = vpack.c.b16 %v803, %v801
    %v902 = vpack.c.b16 %v806, %v804
    %v903 = vpack.c.b16 %v807, %v805
    %v904 = vpack.c.b16 %v810, %v808
    %v905 = vpack.c.b16 %v811, %v809
    %v906 = vpack.c.b16 %v814, %v812
    %v907 = vpack.c.b16 %v815, %v813
    %v908 = vpack.c.b16 %v818, %v816
    %v909 = vpack.c.b16 %v819, %v817
    %v910 = vpack.c.b16 %v822, %v820
    %v911 = vpack.c.b16 %v823, %v821
    %v912 = vpack.c.b16 %v826, %v824
    %v913 = vpack.c.b16 %v827, %v825
    %v914 = vpack.c.b16 %v830, %v828
    %v915 = vpack.c.b16 %v831, %v829
    %v916 = vpack.c.b16 %v834, %v832
    %v917 = vpack.c.b16 %v835, %v833
    %v918 = vpack.c.b16 %v838, %v836
    %v919 = vpack.c.b16 %v839, %v837
    %v920 = vpack.c.b16 %v842, %v840
    %v921 = vpack.c.b16 %v843, %v841
    %v922 = vpack.c.b16 %v846, %v844
    %v923 = vpack.c.b16 %v847, %v845
    %v924 = vpack.c.b16 %v850, %v848
    %v925 = vpack.c.b16 %v851, %v849
    %v926 = vpack.c.b16 %v854, %v852
    %v927 = vpack.c.b16 %v855, %v853
    %v928 = vpack.c.b16 %v858, %v856
    %v929 = vpack.c.b16 %v859, %v857
    %v930 = vpack.c.b16 %v862, %v860
    %v931 = vpack.c.b16 %v863, %v861
    %v932 = vpack.c.b16 %v866, %v864
    %v933 = vpack.c.b16 %v867, %v865
    %v934 = vpack.c.b16 %v870, %v868
    %v935 = vpack.c.b16 %v871, %v869
    %1000 = vmatprep.subr.bf16.mxu0 %v873
    %1001 = vmatpush1.bf16.msra.mxu0 %v872
    %1002 = vmatprep.subr.bf16.mxu0 %v875
    %1003 = vmatpush1.bf16.msra.mxu0 %v874
    %1004 = vmatprep.subr.bf16.mxu0 %v877
    %1005 = vmatpush1.bf16.msra.mxu0 %v876
    %1006 = vmatprep.subr.bf16.mxu0 %v879
    %1007 = vmatpush1.bf16.msra.mxu0 %v878
    %1008 = vmatprep.subr.bf16.mxu0 %v881
    %1009 = vmatpush1.bf16.msra.mxu0 %v880
    %1010 = vmatprep.subr.bf16.mxu0 %v883
    %1011 = vmatpush1.bf16.msra.mxu0 %v882
    %1012 = vmatprep.subr.bf16.mxu0 %v885
    %1013 = vmatpush1.bf16.msra.mxu0 %v884
    %1014 = vmatprep.subr.bf16.mxu0 %v887
    %1015 = vmatpush1.bf16.msra.mxu0 %v886
    %1016 = vmatprep.subr.bf16.mxu0 %v889
    %1017 = vmatpush1.bf16.msra.mxu0 %v888
    %1018 = vmatprep.subr.bf16.mxu0 %v891
    %1019 = vmatpush1.bf16.msra.mxu0 %v890
    %1020 = vmatprep.subr.bf16.mxu0 %v893
    %1021 = vmatpush1.bf16.msra.mxu0 %v892
    %1022 = vmatprep.subr.bf16.mxu0 %v895
    %1023 = vmatpush1.bf16.msra.mxu0 %v894
    %1024 = vmatprep.subr.bf16.mxu0 %v897
    %1025 = vmatpush1.bf16.msra.mxu0 %v896
    %1026 = vmatprep.subr.bf16.mxu0 %v899
    %1027 = vmatpush1.bf16.msra.mxu0 %v898
    %1028 = vmatprep.subr.bf16.mxu0 %v901
    %1029 = vmatpush1.bf16.msra.mxu0 %v900
    %1030 = vmatprep.subr.bf16.mxu0 %v903
    %1031 = vmatpush1.bf16.msra.mxu0 %v902
    %1032 = vmatprep.mubr.bf16.mxu0 %v601
    %1033 = vmatmul.mubr.bf16.gmra.mrb[0].mxu0 %v600
    %v1034 = vpop.f32.mrb[0].mxu0
    %v1035 = vadd.f32 %v673, %v1034
    %v1036 = vpop.f32.mrb[0].mxu0
    %v1037 = vadd.f32 %v677, %v1036
    %v1038 = vpop.f32.mrb[0].mxu0
    %v1039 = vadd.f32 %v673, %v1038
    %v1040 = vpop.f32.mrb[0].mxu0
    %v1041 = vadd.f32 %v677, %v1040
    %1042 = vdwg.mxu0
    %1043 = vmatprep.subr.bf16.mxu0 %v905
    %1044 = vmatpush1.bf16.msra.mxu0 %v904
    %1045 = vmatprep.subr.bf16.mxu0 %v907
    %1046 = vmatpush1.bf16.msra.mxu0 %v906
    %1047 = vmatprep.subr.bf16.mxu0 %v909
    %1048 = vmatpush1.bf16.msra.mxu0 %v908
    %1049 = vmatprep.subr.bf16.mxu0 %v911
    %1050 = vmatpush1.bf16.msra.mxu0 %v910
    %1051 = vmatprep.subr.bf16.mxu0 %v913
    %1052 = vmatpush1.bf16.msra.mxu0 %v912
    %1053 = vmatprep.subr.bf16.mxu0 %v915
    %1054 = vmatpush1.bf16.msra.mxu0 %v914
    %1055 = vmatprep.subr.bf16.mxu0 %v917
    %1056 = vmatpush1.bf16.msra.mxu0 %v916
    %1057 = vmatprep.subr.bf16.mxu0 %v919
    %1058 = vmatpush1.bf16.msra.mxu0 %v918
    %1059 = vmatprep.subr.bf16.mxu0 %v921
    %1060 = vmatpush1.bf16.msra.mxu0 %v920
    %1061 = vmatprep.subr.bf16.mxu0 %v923
    %1062 = vmatpush1.bf16.msra.mxu0 %v922
    %1063 = vmatprep.subr.bf16.mxu0 %v925
    %1064 = vmatpush1.bf16.msra.mxu0 %v924
    %1065 = vmatprep.subr.bf16.mxu0 %v927
    %1066 = vmatpush1.bf16.msra.mxu0 %v926
    %1067 = vmatprep.subr.bf16.mxu0 %v929
    %1068 = vmatpush1.bf16.msra.mxu0 %v928
    %1069 = vmatprep.subr.bf16.mxu0 %v931
    %1070 = vmatpush1.bf16.msra.mxu0 %v930
    %1071 = vmatprep.subr.bf16.mxu0 %v933
    %1072 = vmatpush1.bf16.msra.mxu0 %v932
    %1073 = vmatprep.subr.bf16.mxu0 %v935
    %1074 = vmatpush1.bf16.msra.mxu0 %v934
    %1075 = vmatprep.mubr.bf16.mxu0 %v603
    %1076 = vmatmul.mubr.bf16.gmra.mrb[0].mxu0 %v602
    %v1077 = vpop.f32.mrb[0].mxu0
    %v1078 = vadd.f32 %v1035, %v1077
    %v1079 = vpop.f32.mrb[0].mxu0
    %v1080 = vadd.f32 %v1037, %v1079
    %v1081 = vpop.f32.mrb[0].mxu0
    %v1082 = vadd.f32 %v1039, %v1081
    %v1083 = vpop.f32.mrb[0].mxu0
    %v1084 = vadd.f32 %v1041, %v1083
    %1085 = vdwg.mxu0
    %1086 = vst [vmem:[#allocation8] sm:$0xff] %v1078
    %1087 = vst [vmem:[#allocation8 + $0x8] sm:$0xff] %v1080
    %1088 = vst [vmem:[#allocation8 + $0x10] sm:$0xff] %v1082
    %1089 = vst [vmem:[#allocation8 + $0x18] sm:$0xff] %v1084
    // Predicated region
    $region34: #{feed_forward.1} parent=1 // pred_check
      _
    $region35: #{feed_forward.1} parent=1 // pred_check_branch
      %1091 = sbr.rel (0) target = $region37
    $region36: #{feed_forward.1} parent=1 // pred_region
      %s1093 = ssub.s32 512, 512
      %1094 = vsyncadd [#allocation4], %s1093
      %s1095 = sshll.u32 [#allocation8], 4
      %s1096 = int_to_ptr.vmem [resolvable:$true] %s1095
      %1101 = dma.vmem_to_hbm [thread:$0]  %s1096, 512, %s5, [#allocation4], 256, 256, 16
    $region37: #{feed_forward.1} parent=1 // pred_fallthru
      _
    // Predicated region
    $region38: #{feed_forward.1} parent=1 // pred_check
      _
    $region39: #{feed_forward.1} parent=1 // pred_check_branch
      %1103 = sbr.rel (0) target = $region41
    $region40: #{feed_forward.1} parent=1 // pred_region
      %1104 = dma.done [#allocation4], 512
    $region41: #{feed_forward.1} parent=1 // pred_fallthru
      _
    %1105 = vsyncpa [#allocation3], 1
    %1106 = vsyncpa [#allocation6], 1
    %1107 = vsyncpa [#allocation4], 1

</llo_original>
